<compile_context>
chip_gen: v7x
topology: tpu7x:2x2x1
jax: 0.10.0
libtpu: 0.0.40
codegen_flags: <defaults>
</compile_context>

<pallas_src>
import jax
import jax.numpy as jnp
from jax.experimental import pallas as pl
from jax.experimental.pallas import tpu as pltpu


# ---------------------------------------------------------------------------
# Kernels
# ---------------------------------------------------------------------------

def _fc_single_block_kernel(x_ref, wt_ref, b_ref, o_ref):
    """Whole-problem kernel: o = relu(x_bf16 @ w_bin_T + b).

    wt_ref is the pre-binarized, pre-transposed (K, N) int8 weight; it is
    upcast to exact +-1 bf16 right before the MXU dot.
    """
    w_bf = wt_ref[...].astype(jnp.bfloat16)
    y = jnp.dot(x_ref[...], w_bf, preferred_element_type=jnp.float32)
    o_ref[...] = jnp.maximum(y + b_ref[...], 0.0).astype(o_ref.dtype)


def _fc_tiled_kernel(x_ref, wt_ref, b_ref, o_ref):
    """Tiled kernel: accumulate directly into the f32 VMEM-resident output
    block (its block index is constant across the K axis); bias + ReLU only
    on the last K step."""
    k = pl.program_id(2)

    partial = jnp.dot(
        x_ref[...],                               # bf16 activation tile
        wt_ref[...].astype(jnp.bfloat16),         # int8 -> bf16 (+-1 exact)
        preferred_element_type=jnp.float32)

    @pl.when(k == 0)
    def _init():
        o_ref[...] = partial

    @pl.when(k > 0)
    def _accum():
        o_ref[...] += partial

    @pl.when(k == pl.num_programs(2) - 1)
    def _epilogue():
        o_ref[...] = jnp.maximum(o_ref[...] + b_ref[...], 0.0)


# ---------------------------------------------------------------------------
# Parameter prep (call ONCE, outside the per-step forward path)
# ---------------------------------------------------------------------------

def fc_prepare_params(w, b):
    """One-time weight/bias prep.

    w: (N, K) f32 (torch nn.Linear layout), b: (N,) f32.
    Returns:
      wt_i8: (K, N) int8, binarized to exact +-1 and pre-transposed.
      b2d  : (1, N) f32 bias.
    """
    wt_i8 = jnp.where(w >= 0, 1, -1).astype(jnp.int8).T      # (K, N)
    b2d = b.reshape(1, -1).astype(jnp.float32)
    return wt_i8, b2d


# ---------------------------------------------------------------------------
# Forward wrapper
# ---------------------------------------------------------------------------

def fc_forward(x, wt_i8, b2d, *, tiled=None, tm=256, tn=512, tk=512,
               single_block_vmem_limit=2 << 20):
    """relu(x @ w_bin^T + b) on TPU via Pallas, with pre-prepped params.

    x: (M, K) f32 or bf16; wt_i8: (K, N) int8 from fc_prepare_params;
    b2d: (1, N) f32.  Returns (M, N) f32.
    """
    M, K = x.shape
    Kw, N = wt_i8.shape
    assert K == Kw and b2d.shape == (1, N)

    # bf16 activations: half the HBM DMA and half the VMEM tile vs f32.
    x_bf = x.astype(jnp.bfloat16)

    if tiled is None:
        # Single-block VMEM footprint: x bf16 + wt int8 + bias + f32 output.
        approx_bytes = 2 * M * K + K * N + 4 * N + 4 * M * N
        tiled = approx_bytes > single_block_vmem_limit

    if not tiled:
        # Gridless single-block call: no pipeline steps, no per-step overhead.
        return pl.pallas_call(
            _fc_single_block_kernel,
            out_shape=jax.ShapeDtypeStruct((M, N), jnp.float32),
            in_specs=[
                pl.BlockSpec(memory_space=pltpu.MemorySpace.VMEM),
                pl.BlockSpec(memory_space=pltpu.MemorySpace.VMEM),
                pl.BlockSpec(memory_space=pltpu.MemorySpace.VMEM),
            ],
            out_specs=pl.BlockSpec(memory_space=pltpu.MemorySpace.VMEM),
        )(x_bf, wt_i8, b2d)

    # Tiled path for real layer sizes.
    tm = min(tm, M)
    tn = min(tn, N)
    tk = min(tk, K)
    assert M % tm == 0 and N % tn == 0 and K % tk == 0, (
        "TODO(synk): pad ragged dims to tile multiples")
    grid = (M // tm, N // tn, K // tk)

    return pl.pallas_call(
        _fc_tiled_kernel,
        out_shape=jax.ShapeDtypeStruct((M, N), jnp.float32),
        grid_spec=pltpu.PrefetchScalarGridSpec(
            num_scalar_prefetch=0,
            grid=grid,
            in_specs=[
                pl.BlockSpec((tm, tk), lambda i, j, k: (i, k)),   # x (bf16)
                pl.BlockSpec((tk, tn), lambda i, j, k: (k, j)),   # w_bin^T (i8)
                pl.BlockSpec((1, tn), lambda i, j, k: (0, j)),    # bias (f32)
            ],
            out_specs=pl.BlockSpec((tm, tn), lambda i, j, k: (i, j)),
        ),
        compiler_params=pltpu.CompilerParams(
            dimension_semantics=("parallel", "parallel", "arbitrary")),
    )(x_bf, wt_i8, b2d)


# ---------------------------------------------------------------------------
# References & checks
# ---------------------------------------------------------------------------

def fc_reference_f32(x, w, b):
    """Module semantics in pure f32 (as the torch module computes)."""
    w_bin = jnp.where(w >= 0, 1.0, -1.0)
    return jnp.maximum(x @ w_bin.T + b, 0.0)


def fc_reference_bf16(x, w, b):
    """Same numerics as the kernel: bf16 MXU operands, f32 accumulation."""
    w_bin = jnp.where(w >= 0, 1.0, -1.0).astype(jnp.bfloat16)
    y = jnp.dot(x.astype(jnp.bfloat16), w_bin.T,
                preferred_element_type=jnp.float32)
    return jnp.maximum(y + b, 0.0)


def _check(out, x, w, b):
    assert out.shape == (x.shape[0], w.shape[0])
    # Tight check vs. a reference with identical (bf16-in, f32-acc) numerics.
    ref_bf16 = fc_reference_bf16(x, w, b)
    assert jnp.allclose(out, ref_bf16, atol=2e-3, rtol=2e-3), \
        "mismatch vs bf16-matched reference"
    # Loose check vs. the full-f32 module semantics; the only deviation is the
    # bf16 rounding of x before the MXU (weights are exact +-1).
    ref_f32 = fc_reference_f32(x, w, b)
    assert jnp.allclose(out, ref_f32, atol=5e-1, rtol=5e-2), \
        "mismatch vs f32 reference"


if __name__ == "__main__":
    key = jax.random.PRNGKey(0)
    k1, k2, k3, k4, k5, k6 = jax.random.split(key, 6)

    # --- Small FC layer: exercises the gridless single-block path. ---
    M1, K1, N1 = 8, 128, 128
    x1 = jax.random.normal(k1, (M1, K1), dtype=jnp.float32)
    w1 = jax.random.normal(k2, (N1, K1), dtype=jnp.float32) * 0.1
    b1 = jax.random.normal(k3, (N1,), dtype=jnp.float32) * 0.1
    wt1, b1_2d = fc_prepare_params(w1, b1)          # one-time param prep
    out1 = jax.block_until_ready(fc_forward(x1, wt1, b1_2d))
    _check(out1, x1, w1, b1)

    # --- Larger FC layer: exercises the tiled path with a >1 grid on every
    #     axis (tiles forced below the defaults so all grid branches run). ---
    M2, K2, N2 = 256, 512, 512
    x2 = jax.random.normal(k4, (M2, K2), dtype=jnp.float32)
    w2 = jax.random.normal(k5, (N2, K2), dtype=jnp.float32) * 0.1
    b2 = jax.random.normal(k6, (N2,), dtype=jnp.float32) * 0.1
    wt2, b2_2d = fc_prepare_params(w2, b2)
    out2 = jax.block_until_ready(
        fc_forward(x2, wt2, b2_2d, tiled=True, tm=128, tn=256, tk=256))
    _check(out2, x2, w2, b2)

    print("KERNEL_OK")
</pallas_src>

<mosaic_0001>
module attributes {stable_mosaic.version = 11 : i64} {
  func.func @_fc_single_block_kernel(%arg0: memref<8x128xbf16, #tpu.memory_space<vmem>>, %arg1: memref<128x128xi8, #tpu.memory_space<vmem>>, %arg2: memref<1x128xf32, #tpu.memory_space<vmem>>, %arg3: memref<8x128xf32, #tpu.memory_space<vmem>>) attributes {dimension_semantics = [], scalar_prefetch = 0 : i64, scratch_operands = 0 : i64, tpu.core_type = #tpu.core_type<tc>} {
    %c0 = arith.constant 0 : index
    %c0_0 = arith.constant 0 : index
    %0 = vector.load %arg1[%c0, %c0_0] : memref<128x128xi8, #tpu.memory_space<vmem>>, vector<128x128xi8>
    %1 = arith.sitofp %0 : vector<128x128xi8> to vector<128x128xbf16>
    %c0_1 = arith.constant 0 : index
    %c0_2 = arith.constant 0 : index
    %2 = vector.load %arg0[%c0_1, %c0_2] : memref<8x128xbf16, #tpu.memory_space<vmem>>, vector<8x128xbf16>
    %cst = arith.constant dense<0.000000e+00> : vector<8x128xf32>
    %3 = tpu.matmul %2, %1, %cst {dimension_numbers = #tpu.dot_dimension_numbers<[1], [0], [0], [1], [0, 0, 1, 1], [], []>} : vector<8x128xbf16>, vector<128x128xbf16>, vector<8x128xf32> -> vector<8x128xf32>
    %c0_3 = arith.constant 0 : index
    %c0_4 = arith.constant 0 : index
    %4 = vector.load %arg2[%c0_3, %c0_4] : memref<1x128xf32, #tpu.memory_space<vmem>>, vector<1x128xf32>
    %5 = vector.broadcast %4 : vector<1x128xf32> to vector<8x128xf32>
    %6 = arith.addf %3, %5 : vector<8x128xf32>
    %cst_5 = arith.constant 0.000000e+00 : f32
    %7 = vector.broadcast %cst_5 : f32 to vector<8x128xf32>
    %8 = arith.maximumf %6, %7 : vector<8x128xf32>
    %c0_6 = arith.constant 0 : index
    %c0_7 = arith.constant 0 : index
    %9 = vector.load %arg3[%c0_6, %c0_7] : memref<8x128xf32, #tpu.memory_space<vmem>>, vector<8x128xf32>
    tpu.vector_store %arg3[%c0_6, %c0_7], %8 {strides = array<i32>} : memref<8x128xf32, #tpu.memory_space<vmem>>, vector<8x128xf32>,
    return
  }
}

</mosaic_0001>

<llo_original>
// kernel: tpu_custom_call.1
$region0: #{tpu_custom_call.1}
  #allocation0 [shape = 'u32[]', space=smem, size = 0x4, offset = 0x4, fixed_abs, tag = 'smem constant byte address 0x4 - core index']
  #allocation1 [shape = 'u32[144,128]{1,0:T(1,128)}', space=vmem, size = 0x12000, scoped, tag = 'internal scratch']
  %s0 = inlined_call_operand.hbm [shape: bf16[8,128], index: 0, kind: input, shape index: {}]
  %s1 = inlined_call_operand.hbm [shape: s8[128,128], index: 1, kind: input, shape index: {}]
  %s2 = inlined_call_operand.vmem [shape: f32[1,128], index: 2, kind: input, shape index: {}]
  %s3 = inlined_call_operand.hbm [shape: f32[8,128], index: 3, kind: output, shape index: {}]
  %s4 = sld [smem:[#allocation0]]
  $region30: #{tpu_custom_call.1} parent=0
    _
  %s6 = ssub.s32 1, %s4
  %s7 = scalar_select 0, %s6, %s4
  $region1: #{tpu_custom_call.1} parent=0
    #allocation2 [shape = 'u8[2048]{0}', space=vmem, size = 0x800, scoped, tag = 'input window, operand 0, single buffered']
    #allocation3 [shape = 's32[1]{0}', space=sflag, size = 0x4, scoped, tag = 'scoped memory for tpu_custom_call.1']
    #allocation4 [shape = 's32[1]{0}', space=sflag, size = 0x4, scoped, tag = 'scoped memory for tpu_custom_call.1']
    #allocation5 [shape = 'u8[16384]{0}', space=vmem, size = 0x4000, scoped, tag = 'input window, operand 1, single buffered']
    #allocation6 [shape = 's32[1]{0}', space=sflag, size = 0x4, scoped, tag = 'scoped memory for tpu_custom_call.1']
    #allocation7 [shape = 'u8[4096]{0}', space=vmem, size = 0x1000, scoped, tag = 'output window, operand 0, single buffered']
    %8 = vsyncpa [#allocation3], 0
    %9 = vsyncpa [#allocation6], 0
    %10 = vsyncpa [#allocation4], 0
    // Predicated region
    $region2: #{tpu_custom_call.1} parent=1 // pred_check
      _
    $region3: #{tpu_custom_call.1} parent=1 // pred_check_branch
      %12 = sbr.rel (0) target = $region5
    $region4: #{tpu_custom_call.1} parent=1 // pred_region
      %s14 = ssub.s32 64, 64
      %15 = vsyncadd [#allocation3], %s14
      %s17 = sshll.u32 [#allocation2], 4
      %s18 = int_to_ptr.vmem [resolvable:$true] %s17
      %20 = dma.hbm_to_vmem [thread:$0]  %s0, 64, %s18, [#allocation3]
    $region5: #{tpu_custom_call.1} parent=1 // pred_fallthru
      _
    // Predicated region
    $region6: #{tpu_custom_call.1} parent=1 // pred_check
      _
    $region7: #{tpu_custom_call.1} parent=1 // pred_check_branch
      %22 = sbr.rel (0) target = $region9
    $region8: #{tpu_custom_call.1} parent=1 // pred_region
      %s24 = ssub.s32 512, 512
      %25 = vsyncadd [#allocation6], %s24
      %s26 = sshll.u32 [#allocation5], 4
      %s27 = int_to_ptr.vmem [resolvable:$true] %s26
      %32 = dma.hbm_to_vmem [thread:$0]  %s1, 512, %s27, [#allocation6], 128, 128, 8
    $region9: #{tpu_custom_call.1} parent=1 // pred_fallthru
      _
    // Predicated region
    $region10: #{tpu_custom_call.1} parent=1 // pred_check
      _
    $region11: #{tpu_custom_call.1} parent=1 // pred_check_branch
      %34 = sbr.rel (0) target = $region13
    $region12: #{tpu_custom_call.1} parent=1 // pred_region
      _
    $region13: #{tpu_custom_call.1} parent=1 // pred_fallthru
      _
    // Predicated region
    $region14: #{tpu_custom_call.1} parent=1 // pred_check
      _
    $region15: #{tpu_custom_call.1} parent=1 // pred_check_branch
      %36 = sbr.rel (0) target = $region17
    $region16: #{tpu_custom_call.1} parent=1 // pred_region
      %37 = dma.done [#allocation3], 64
    $region17: #{tpu_custom_call.1} parent=1 // pred_fallthru
      _
    // Predicated region
    $region18: #{tpu_custom_call.1} parent=1 // pred_check
      _
    $region19: #{tpu_custom_call.1} parent=1 // pred_check_branch
      %39 = sbr.rel (0) target = $region21
    $region20: #{tpu_custom_call.1} parent=1 // pred_region
      %40 = dma.done [#allocation6], 512
    $region21: #{tpu_custom_call.1} parent=1 // pred_fallthru
      _
    %v42 = vld [vmem:[#allocation5] sm:$0xff]
    %v43 = vld [vmem:[#allocation5 + $0x8] sm:$0xff]
    %v44 = vld [vmem:[#allocation5 + $0x10] sm:$0xff]
    %v45 = vld [vmem:[#allocation5 + $0x18] sm:$0xff]
    %v46 = vunpack.c.l.s8.bf16 %v42
    %v47 = vunpack.c.h.s8.bf16 %v42
    %v48 = vunpack.c.l.s8.bf16 %v43
    %v49 = vunpack.c.h.s8.bf16 %v43
    %v50 = vunpack.c.l.s8.bf16 %v44
    %v51 = vunpack.c.h.s8.bf16 %v44
    %v52 = vunpack.c.l.s8.bf16 %v45
    %v53 = vunpack.c.h.s8.bf16 %v45
    %v54 = vld [vmem:[#allocation2] sm:$0xf]
    %v55 = vld [vmem:[%s2] sm:$0x1]
    %v57 = vlaneseq
    %v58 = vshrl.u32 %v57, 7
    %v59 = vsub.s32 0, %v58
    %v60 = vrot.slane %v55, %v59
    %62 = vmatprep.subr.bf16.mxu0 0
    %63 = vmatpush1.bf16.msra.mxu0 %v46
    %64 = vmatprep.subr.bf16.mxu0 0
    %65 = vmatpush1.bf16.msra.mxu0 %v47
    %66 = vmatprep.subr.bf16.mxu0 0
    %67 = vmatpush1.bf16.msra.mxu0 %v48
    %68 = vmatprep.subr.bf16.mxu0 0
    %69 = vmatpush1.bf16.msra.mxu0 %v49
    %70 = vmatprep.subr.bf16.mxu0 0
    %71 = vmatpush1.bf16.msra.mxu0 %v50
    %72 = vmatprep.subr.bf16.mxu0 0
    %73 = vmatpush1.bf16.msra.mxu0 %v51
    %74 = vmatprep.subr.bf16.mxu0 0
    %75 = vmatpush1.bf16.msra.mxu0 %v52
    %76 = vmatprep.subr.bf16.mxu0 0
    %77 = vmatpush1.bf16.msra.mxu0 %v53
    %78 = vmatprep.subr.bf16.mxu0 0
    %79 = vmatpush1.bf16.msra.mxu0 0
    %80 = vmatprep.subr.bf16.mxu0 0
    %81 = vmatpush1.bf16.msra.mxu0 0
    %82 = vmatprep.subr.bf16.mxu0 0
    %83 = vmatpush1.bf16.msra.mxu0 0
    %84 = vmatprep.subr.bf16.mxu0 0
    %85 = vmatpush1.bf16.msra.mxu0 0
    %86 = vmatprep.subr.bf16.mxu0 0
    %87 = vmatpush1.bf16.msra.mxu0 0
    %88 = vmatprep.subr.bf16.mxu0 0
    %89 = vmatpush1.bf16.msra.mxu0 0
    %90 = vmatprep.subr.bf16.mxu0 0
    %91 = vmatpush1.bf16.msra.mxu0 0
    %92 = vmatprep.subr.bf16.mxu0 0
    %93 = vmatpush1.bf16.msra.mxu0 0
    %94 = vmatprep.mubr.bf16.mxu0 0
    %95 = vmatmul.mubr.bf16.gmra.mrb[0].mxu0 %v54
    %v96 = vpop.f32.mrb[0].mxu0
    %v97 = vadd.f32 %v60, %v96
    %v98 = vpop.f32.mrb[0].mxu0
    %v99 = vpop.f32.mrb[0].mxu0
    %v100 = vpop.f32.mrb[0].mxu0
    %101 = vdwg.mxu0
    %v102 = vmax.f32 %v97, 0.0
    %103 = vst [vmem:[#allocation7] sm:$0xff] %v102
    // Predicated region
    $region22: #{tpu_custom_call.1} parent=1 // pred_check
      _
    $region23: #{tpu_custom_call.1} parent=1 // pred_check_branch
      %105 = sbr.rel (0) target = $region25
    $region24: #{tpu_custom_call.1} parent=1 // pred_region
      %s107 = ssub.s32 128, 128
      %108 = vsyncadd [#allocation4], %s107
      %s110 = sshll.u32 [#allocation7], 4
      %s111 = int_to_ptr.vmem [resolvable:$true] %s110
      %113 = dma.vmem_to_hbm [thread:$0]  %s111, 128, %s3, [#allocation4]
    $region25: #{tpu_custom_call.1} parent=1 // pred_fallthru
      _
    // Predicated region
    $region26: #{tpu_custom_call.1} parent=1 // pred_check
      _
    $region27: #{tpu_custom_call.1} parent=1 // pred_check_branch
      %115 = sbr.rel (0) target = $region29
    $region28: #{tpu_custom_call.1} parent=1 // pred_region
      %116 = dma.done [#allocation4], 128
    $region29: #{tpu_custom_call.1} parent=1 // pred_fallthru
      _
    %117 = vsyncpa [#allocation3], 1
    %118 = vsyncpa [#allocation6], 1
    %119 = vsyncpa [#allocation4], 1

</llo_original>
